<compile_context>
chip_gen: v5e
topology: v5e:2x2
jax: 0.10.0
libtpu: 0.0.40
codegen_flags: <defaults>
</compile_context>

<pallas_src>
import functools

import jax
import jax.numpy as jnp
from jax.experimental import pallas as pl
from jax.experimental.pallas import tpu as pltpu


def _round_up(x, m):
    return ((x + m - 1) // m) * m


# ---------------------------------------------------------------------------
# Kernel: one (token-tile i, intermediate-tile j) step of the SiLU-gated MLP.
# ---------------------------------------------------------------------------
def _mlp_kernel(x_ref, wgu_ref, wd_ref, o_ref, acc_ref):
    j = pl.program_id(1)

    x = x_ref[...]                                                    # (tm, H)
    # Fused gate/up tile: a single DMA'd (2, H, tn) block, two MXU matmuls.
    g = jnp.dot(x, wgu_ref[0], preferred_element_type=jnp.float32)   # (tm, tn)
    u = jnp.dot(x, wgu_ref[1], preferred_element_type=jnp.float32)   # (tm, tn)
    # SiLU(g) * u in f32 (VPU + EUP; works on v5e which lacks bf16 VPU/EUP).
    h = (g * jax.nn.sigmoid(g)) * u
    # Partial down_proj for this intermediate tile, f32 accumulation.
    partial = jnp.dot(h.astype(wd_ref.dtype), wd_ref[...],
                      preferred_element_type=jnp.float32)             # (tm, H)

    @pl.when(j == 0)
    def _():                      # first I-tile: overwrite (no zero-init pass)
        acc_ref[...] = partial

    @pl.when(j > 0)
    def _():                      # later I-tiles: accumulate
        acc_ref[...] += partial

    @pl.when(j == pl.num_programs(1) - 1)
    def _():                      # lane-dense (tm, H) writeback
        o_ref[...] = acc_ref[...].astype(o_ref.dtype)


# ---------------------------------------------------------------------------
# One-time weight preparation (outside the per-call hot path).
# ---------------------------------------------------------------------------
def prepare_weights(wg, wu, wd):
    """PyTorch nn.Linear weights are (out_features, in_features).

    Returns:
      w_gu: (2, hidden, intermediate)  -- stacked [gate_proj.T, up_proj.T]
      wd_t: (intermediate, hidden)     -- down_proj.T
    """
    w_gu = jnp.stack([wg.T, wu.T], axis=0)
    return w_gu, wd.T


# ---------------------------------------------------------------------------
# Tiling / VMEM helpers.
# ---------------------------------------------------------------------------
def _device_defaults():
    kind = ""
    try:
        kind = jax.devices()[0].device_kind.lower()
    except Exception:
        pass
    if "v7" in kind:
        cfg = dict(block_m=512, phys_vmem=64 * 2**20, cores=2)
    elif "v6" in kind:
        cfg = dict(block_m=1024, phys_vmem=128 * 2**20, cores=1)
    elif "v5" in kind:
        cfg = dict(block_m=512, phys_vmem=128 * 2**20, cores=1)
    else:  # unknown: be conservative
        cfg = dict(block_m=512, phys_vmem=64 * 2**20, cores=1)
    try:
        cfg["phys_vmem"] = int(pltpu.get_tpu_info().vmem_capacity_bytes)
    except Exception:
        pass
    # Leave ~20% headroom for compiler-internal scratch / semaphores.
    cfg["vmem_cap"] = int(0.80 * cfg["phys_vmem"])
    return cfg


def _tn_candidates(inter_pad, block_n):
    block_n = max(128, block_n)
    cands = [c for c in range(128, inter_pad + 1, 128)
             if inter_pad % c == 0 and c <= block_n]
    if not cands:
        cands = [128]
    return sorted(cands, reverse=True)


def _vmem_bytes(tm, tn, hidden, x_b, w_b, o_b):
    return (2 * tm * hidden * x_b            # x tile (double buffered)
            + 2 * 2 * hidden * tn * w_b      # fused gate+up tile (double buffered)
            + 2 * tn * hidden * w_b          # down_proj tile (double buffered)
            + 2 * tm * hidden * o_b          # output tile (double buffered)
            + tm * hidden * 4)               # f32 accumulator scratch


# ---------------------------------------------------------------------------
# Forward pass wrapper.
# ---------------------------------------------------------------------------
@functools.partial(jax.jit, static_argnames=("block_m", "block_n"))
def llama_mlp(x, w_gu, wd_t, *, block_m=None, block_n=512):
    """x: (..., hidden).  w_gu: (2, hidden, intermediate).  wd_t: (intermediate, hidden).

    Use prepare_weights() once to convert nn.Linear-convention weights.
    """
    orig_shape = x.shape
    hidden = orig_shape[-1]
    inter = w_gu.shape[2]

    cfg = _device_defaults()
    if block_m is None:
        block_m = cfg["block_m"]

    x2d = x.reshape(-1, hidden)
    m = x2d.shape[0]

    # Sublane-aware token tile: 8 rows (f32), 16 (bf16), 32 (int8/fp8).
    sub = {4: 8, 2: 16, 1: 32}.get(x2d.dtype.itemsize, 8)
    tm = min(_round_up(block_m, sub), _round_up(m, sub))

    # v7x megacore: keep the "parallel" token axis >= num_cores steps so the
    # second TensorCore is not idle for small batches.
    if cfg["cores"] > 1 and m > sub:
        split_tm = max(sub, _round_up(-(-m // cfg["cores"]), sub))
        tm = min(tm, split_tm)

    # Intermediate axis: zero-pad to a lane multiple (exact for this MLP since
    # silu(0)*0 == 0 and padded down_proj rows are zero), then stream tn-wide
    # tiles.  Never make the weights fully VMEM resident.
    inter_pad = _round_up(inter, 128)
    if inter_pad != inter:
        w_gu = jnp.pad(w_gu, ((0, 0), (0, 0), (0, inter_pad - inter)))
        wd_t = jnp.pad(wd_t, ((0, inter_pad - inter), (0, 0)))

    tn_list = _tn_candidates(inter_pad, block_n)
    tn = tn_list[0]

    # Shrink tiles until the working set fits the per-generation VMEM budget.
    x_b, w_b, o_b = x2d.dtype.itemsize, w_gu.dtype.itemsize, x.dtype.itemsize
    while _vmem_bytes(tm, tn, hidden, x_b, w_b, o_b) > cfg["vmem_cap"] and tm > sub:
        tm = max(sub, _round_up(tm // 2, sub))
    idx = 0
    while (_vmem_bytes(tm, tn, hidden, x_b, w_b, o_b) > cfg["vmem_cap"]
           and idx + 1 < len(tn_list)):
        idx += 1
        tn = tn_list[idx]

    m_pad = _round_up(m, tm)
    if m_pad != m:
        x2d = jnp.pad(x2d, ((0, m_pad - m), (0, 0)))

    grid = (m_pad // tm, inter_pad // tn)

    out2d = pl.pallas_call(
        _mlp_kernel,
        out_shape=jax.ShapeDtypeStruct((m_pad, hidden), x.dtype),
        grid_spec=pltpu.PrefetchScalarGridSpec(
            num_scalar_prefetch=0,
            grid=grid,
            in_specs=[
                pl.BlockSpec((tm, hidden), lambda i, j: (i, 0)),        # x (reused over j)
                pl.BlockSpec((2, hidden, tn), lambda i, j: (0, 0, j)),  # fused gate+up
                pl.BlockSpec((tn, hidden), lambda i, j: (j, 0)),        # down_proj
            ],
            out_specs=pl.BlockSpec((tm, hidden), lambda i, j: (i, 0)),  # lane-dense
            scratch_shapes=[pltpu.VMEM((tm, hidden), jnp.float32)],
        ),
        compiler_params=pltpu.CompilerParams(
            dimension_semantics=("parallel", "arbitrary"),
            vmem_limit_bytes=int(cfg["vmem_cap"]),
        ),
    )(x2d, w_gu, wd_t)

    if m_pad != m:
        out2d = out2d[:m]
    return out2d.reshape(orig_shape)


# ---------------------------------------------------------------------------
# Reference + tests.
# ---------------------------------------------------------------------------
def _reference_mlp(x, wg, wu, wd):
    # PyTorch nn.Linear convention: y = x @ W.T
    g = x @ wg.T
    u = x @ wu.T
    h = jax.nn.silu(g) * u
    return h @ wd.T


def _make_params(key, hidden, inter, dtype):
    kg, ku, kd = jax.random.split(key, 3)
    bg = 1.0 / (hidden ** 0.5)
    bd = 1.0 / (inter ** 0.5)
    wg = jax.random.uniform(kg, (inter, hidden), jnp.float32, -bg, bg).astype(dtype)
    wu = jax.random.uniform(ku, (inter, hidden), jnp.float32, -bg, bg).astype(dtype)
    wd = jax.random.uniform(kd, (hidden, inter), jnp.float32, -bd, bd).astype(dtype)
    return wg, wu, wd


if __name__ == "__main__":
    key = jax.random.PRNGKey(0)
    k1, k2, k3, k4 = jax.random.split(key, 4)

    # --- Test 1: toy config (hidden=32, intermediate=64, silu), f32, exercises
    #             the intermediate-padding path and auto tile selection. ---
    batch, seq, hidden, inter = 2, 8, 32, 64
    x = jax.random.normal(k1, (batch, seq, hidden), dtype=jnp.float32)
    wg, wu, wd = _make_params(k2, hidden, inter, jnp.float32)

    w_gu, wd_t = prepare_weights(wg, wu, wd)          # one-time, outside hot path
    out = jax.block_until_ready(llama_mlp(x, w_gu, wd_t))

    ref = _reference_mlp(x, wg, wu, wd)
    assert out.shape == x.shape
    assert jnp.allclose(out, ref, atol=1e-5, rtol=1e-5), "f32 mismatch vs reference"

    # --- Test 2: tiled/accumulating path (multi-step grid over tokens and the
    #             intermediate axis), bf16 activations+weights, f32 accumulation. ---
    batch, seq, hidden, inter = 2, 64, 256, 512
    xb = jax.random.normal(k3, (batch, seq, hidden), dtype=jnp.float32).astype(jnp.bfloat16)
    wgb, wub, wdb = _make_params(k4, hidden, inter, jnp.bfloat16)

    w_gub, wd_tb = prepare_weights(wgb, wub, wdb)
    outb = jax.block_until_ready(
        llama_mlp(xb, w_gub, wd_tb, block_m=64, block_n=128))

    refb = _reference_mlp(xb.astype(jnp.float32), wgb.astype(jnp.float32),
                          wub.astype(jnp.float32), wdb.astype(jnp.float32))
    assert outb.shape == xb.shape
    assert jnp.allclose(outb.astype(jnp.float32), refb, atol=5e-2, rtol=5e-2), \
        "bf16 mismatch vs reference"

    # TODO(synk): optional fp8 weight storage for v7x decode (halves weight HBM
    # stream) is not implemented; weights are consumed in their given dtype.
    print("KERNEL_OK")
</pallas_src>

<mosaic_0001>
module attributes {stable_mosaic.version = 11 : i64} {
  func.func @_mlp_kernel(%arg0: i32, %arg1: i32, %arg2: memref<16x32xf32, #tpu.memory_space<vmem>>, %arg3: memref<2x32x128xf32, #tpu.memory_space<vmem>>, %arg4: memref<128x32xf32, #tpu.memory_space<vmem>>, %arg5: memref<16x32xf32, #tpu.memory_space<vmem>>, %arg6: memref<16x32xf32, #tpu.memory_space<vmem>>) attributes {dimension_semantics = [#tpu.dimension_semantics<parallel>, #tpu.dimension_semantics<arbitrary>], iteration_bounds = array<i64: 1, 1>, scalar_prefetch = 0 : i64, scratch_operands = 1 : i64, tpu.core_type = #tpu.core_type<tc>, window_params = [{transform_indices = @transform_0, window_bounds = array<i64: 16, 32>}, {transform_indices = @transform_1, window_bounds = array<i64: 2, 32, 128>}, {transform_indices = @transform_2, window_bounds = array<i64: 128, 32>}, {transform_indices = @transform_3, window_bounds = array<i64: 16, 32>}]} {
    %c0 = arith.constant 0 : index
    %c0_0 = arith.constant 0 : index
    %0 = vector.load %arg2[%c0, %c0_0] : memref<16x32xf32, #tpu.memory_space<vmem>>, vector<16x32xf32>
    %c0_1 = arith.constant 0 : index
    %c0_2 = arith.constant 0 : index
    %c0_3 = arith.constant 0 : index
    %1 = vector.load %arg3[%c0_1, %c0_2, %c0_3] : memref<2x32x128xf32, #tpu.memory_space<vmem>>, vector<1x32x128xf32>
    %2 = vector.shape_cast %1 : vector<1x32x128xf32> to vector<32x128xf32>
    %cst = arith.constant dense<0.000000e+00> : vector<16x128xf32>
    %3 = tpu.matmul %0, %2, %cst {dimension_numbers = #tpu.dot_dimension_numbers<[1], [0], [0], [1], [0, 0, 1, 1], [], []>} : vector<16x32xf32>, vector<32x128xf32>, vector<16x128xf32> -> vector<16x128xf32>
    %c1 = arith.constant 1 : index
    %c0_4 = arith.constant 0 : index
    %c0_5 = arith.constant 0 : index
    %4 = vector.load %arg3[%c1, %c0_4, %c0_5] : memref<2x32x128xf32, #tpu.memory_space<vmem>>, vector<1x32x128xf32>
    %5 = vector.shape_cast %4 : vector<1x32x128xf32> to vector<32x128xf32>
    %cst_6 = arith.constant dense<0.000000e+00> : vector<16x128xf32>
    %6 = tpu.matmul %0, %5, %cst_6 {dimension_numbers = #tpu.dot_dimension_numbers<[1], [0], [0], [1], [0, 0, 1, 1], [], []>} : vector<16x32xf32>, vector<32x128xf32>, vector<16x128xf32> -> vector<16x128xf32>
    %7 = arith.negf %3 : vector<16x128xf32>
    %8 = math.exp %7 : vector<16x128xf32>
    %cst_7 = arith.constant 1.000000e+00 : f32
    %9 = vector.broadcast %cst_7 : f32 to vector<16x128xf32>
    %10 = arith.addf %9, %8 : vector<16x128xf32>
    %11 = arith.divf %9, %10 : vector<16x128xf32>
    %12 = arith.mulf %3, %11 : vector<16x128xf32>
    %13 = arith.mulf %12, %6 : vector<16x128xf32>
    %c0_8 = arith.constant 0 : index
    %c0_9 = arith.constant 0 : index
    %14 = vector.load %arg4[%c0_8, %c0_9] : memref<128x32xf32, #tpu.memory_space<vmem>>, vector<128x32xf32>
    %cst_10 = arith.constant dense<0.000000e+00> : vector<16x32xf32>
    %15 = tpu.matmul %13, %14, %cst_10 {dimension_numbers = #tpu.dot_dimension_numbers<[1], [0], [0], [1], [0, 0, 1, 1], [], []>} : vector<16x128xf32>, vector<128x32xf32>, vector<16x32xf32> -> vector<16x32xf32>
    %c0_i32 = arith.constant 0 : i32
    %16 = arith.cmpi eq, %arg1, %c0_i32 : i32
    %17 = arith.extui %16 : i1 to i32
    %c0_i32_11 = arith.constant 0 : i32
    %18 = arith.cmpi ne, %17, %c0_i32_11 : i32
    scf.if %18 {
      %c0_16 = arith.constant 0 : index
      %c0_17 = arith.constant 0 : index
      %25 = vector.load %arg6[%c0_16, %c0_17] : memref<16x32xf32, #tpu.memory_space<vmem>>, vector<16x32xf32>
      tpu.vector_store %arg6[%c0_16, %c0_17], %15 {strides = array<i32>} : memref<16x32xf32, #tpu.memory_space<vmem>>, vector<16x32xf32>,
    } else {
    }
    %c0_i32_12 = arith.constant 0 : i32
    %19 = arith.cmpi sgt, %arg1, %c0_i32_12 : i32
    %20 = arith.extui %19 : i1 to i32
    %c0_i32_13 = arith.constant 0 : i32
    %21 = arith.cmpi ne, %20, %c0_i32_13 : i32
    scf.if %21 {
      %c0_16 = arith.constant 0 : index
      %c0_17 = arith.constant 0 : index
      %25 = vector.load %arg6[%c0_16, %c0_17] : memref<16x32xf32, #tpu.memory_space<vmem>>, vector<16x32xf32>
      %26 = arith.addf %25, %15 : vector<16x32xf32>
      %c0_18 = arith.constant 0 : index
      %c0_19 = arith.constant 0 : index
      %27 = vector.load %arg6[%c0_18, %c0_19] : memref<16x32xf32, #tpu.memory_space<vmem>>, vector<16x32xf32>
      tpu.vector_store %arg6[%c0_18, %c0_19], %26 {strides = array<i32>} : memref<16x32xf32, #tpu.memory_space<vmem>>, vector<16x32xf32>,
    } else {
    }
    %c0_i32_14 = arith.constant 0 : i32
    %22 = arith.cmpi eq, %arg1, %c0_i32_14 : i32
    %23 = arith.extui %22 : i1 to i32
    %c0_i32_15 = arith.constant 0 : i32
    %24 = arith.cmpi ne, %23, %c0_i32_15 : i32
    scf.if %24 {
      %c0_16 = arith.constant 0 : index
      %c0_17 = arith.constant 0 : index
      %25 = vector.load %arg6[%c0_16, %c0_17] : memref<16x32xf32, #tpu.memory_space<vmem>>, vector<16x32xf32>
      %c0_18 = arith.constant 0 : index
      %c0_19 = arith.constant 0 : index
      %26 = vector.load %arg5[%c0_18, %c0_19] : memref<16x32xf32, #tpu.memory_space<vmem>>, vector<16x32xf32>
      tpu.vector_store %arg5[%c0_18, %c0_19], %25 {strides = array<i32>} : memref<16x32xf32, #tpu.memory_space<vmem>>, vector<16x32xf32>,
    } else {
    }
    return
  }
  func.func @transform_0(%arg0: i32, %arg1: i32) -> (i32, i32) {
    %c0_i32 = arith.constant 0 : i32
    %c0_i32_0 = arith.constant 0 : i32
    return %arg0, %c0_i32 : i32, i32
  }
  func.func @transform_1(%arg0: i32, %arg1: i32) -> (i32, i32, i32) {
    %c0_i32 = arith.constant 0 : i32
    %c0_i32_0 = arith.constant 0 : i32
    %c0_i32_1 = arith.constant 0 : i32
    return %c0_i32, %c0_i32_0, %arg1 : i32, i32, i32
  }
  func.func @transform_2(%arg0: i32, %arg1: i32) -> (i32, i32) {
    %c0_i32 = arith.constant 0 : i32
    %c0_i32_0 = arith.constant 0 : i32
    return %arg1, %c0_i32 : i32, i32
  }
  func.func @transform_3(%arg0: i32, %arg1: i32) -> (i32, i32) {
    %c0_i32 = arith.constant 0 : i32
    %c0_i32_0 = arith.constant 0 : i32
    return %arg0, %c0_i32 : i32, i32
  }
}

</mosaic_0001>

<llo_original>
// kernel: llama_mlp.1
$region0: #{llama_mlp.1}
  #allocation0 [shape = 'u32[]', space=smem, size = 0x4, offset = 0x4, fixed_abs, tag = 'smem constant byte address 0x4 - core index']
  #allocation1 [shape = 'u32[72,128]{1,0:T(1,128)}', space=vmem, size = 0x9000, scoped, tag = 'internal scratch']
  #allocation2 [shape = 'f32[16,32]{1,0:T(8,128)}', space=vmem, size = 0x2000, scoped, tag = 'scratch operand']
  %s0 = inlined_call_operand.vmem [shape: f32[16,32], index: 0, kind: input, shape index: {}]
  %s1 = inlined_call_operand.vmem [shape: f32[2,32,128], index: 1, kind: input, shape index: {}]
  %s2 = inlined_call_operand.vmem [shape: f32[128,32], index: 2, kind: input, shape index: {}]
  %s3 = inlined_call_operand.hbm [shape: f32[16,32], index: 3, kind: output, shape index: {}]
  %s4 = sld [smem:[#allocation0]]
  $region34: #{llama_mlp.1} parent=0
    _
  %s6 = ssub.s32 1, %s4
  %s7 = scalar_select 0, %s6, %s4
  $region1: #{llama_mlp.1} parent=0
    #allocation3 [shape = 'u8[8192]{0}', space=vmem, size = 0x2000, scoped, tag = 'output window, operand 0, single buffered']
    #allocation4 [shape = 's32[1]{0}', space=sflag, size = 0x4, scoped, tag = 'scoped memory for llama_mlp.1']
    %8 = vsyncpa [#allocation4], 0
    // Predicated region
    $region2: #{llama_mlp.1} parent=1 // pred_check
      _
    $region3: #{llama_mlp.1} parent=1 // pred_check_branch
      %10 = sbr.rel (0) target = $region5
    $region4: #{llama_mlp.1} parent=1 // pred_region
      _
    $region5: #{llama_mlp.1} parent=1 // pred_fallthru
      _
    // Predicated region
    $region6: #{llama_mlp.1} parent=1 // pred_check
      _
    $region7: #{llama_mlp.1} parent=1 // pred_check_branch
      %12 = sbr.rel (0) target = $region9
    $region8: #{llama_mlp.1} parent=1 // pred_region
      _
    $region9: #{llama_mlp.1} parent=1 // pred_fallthru
      _
    // Predicated region
    $region10: #{llama_mlp.1} parent=1 // pred_check
      _
    $region11: #{llama_mlp.1} parent=1 // pred_check_branch
      %14 = sbr.rel (0) target = $region13
    $region12: #{llama_mlp.1} parent=1 // pred_region
      _
    $region13: #{llama_mlp.1} parent=1 // pred_fallthru
      _
    %v15 = vld [vmem:[%s0] sm:$0xff]
    %v16 = vld [vmem:[%s0 + $0x8] sm:$0xff]
    %v17 = vld [vmem:[%s1] sm:$0xff]
    %v18 = vld [vmem:[%s1 + $0x8] sm:$0xff]
    %v19 = vld [vmem:[%s1 + $0x10] sm:$0xff]
    %v20 = vld [vmem:[%s1 + $0x18] sm:$0xff]
    %vm21 = vcmask 261120
    %v23 = vsel %vm21, %v15, 0
    %v26 = vsel %vm21, %v16, 0
    %28 = vmatpush.msra.mxu0 0.0
    %29 = vmatpush.msra.mxu0 0.0
    %30 = vmatpush.msra.mxu0 0.0
    %31 = vmatpush.msra.mxu0 0.0
    %32 = vmatpush.msra.mxu0 0.0
    %33 = vmatpush.msra.mxu0 0.0
    %34 = vmatpush.msra.mxu0 0.0
    %35 = vmatpush.msra.mxu0 0.0
    %36 = vmatpush.msra.mxu0 0.0
    %37 = vmatpush.msra.mxu0 0.0
    %38 = vmatpush.msra.mxu0 0.0
    %39 = vmatpush.msra.mxu0 0.0
    %40 = vmatpush.msra.mxu0 %v20
    %41 = vmatpush.msra.mxu0 %v19
    %42 = vmatpush.msra.mxu0 %v18
    %43 = vmatpush.msra.mxu0 %v17
    %44 = vmatmul.f32.gmra.mxu0 %v23
    %v45 = vpop.f32.mrf.mxu0
    %v46 = vadd.f32 0.0, %v45
    %47 = vmatmul.f32.gmra.mxu0 %v26
    %v48 = vpop.f32.mrf.mxu0
    %v49 = vadd.f32 0.0, %v48
    %50 = vdwg.mxu0
    %s51 = scalar_lea.vmem %s1, 32
    %v52 = vld [vmem:[%s51] sm:$0xff]
    %v53 = vld [vmem:[%s51 + $0x8] sm:$0xff]
    %v54 = vld [vmem:[%s51 + $0x10] sm:$0xff]
    %v55 = vld [vmem:[%s51 + $0x18] sm:$0xff]
    %56 = vmatpush.msra.mxu0 0.0
    %57 = vmatpush.msra.mxu0 0.0
    %58 = vmatpush.msra.mxu0 0.0
    %59 = vmatpush.msra.mxu0 0.0
    %60 = vmatpush.msra.mxu0 0.0
    %61 = vmatpush.msra.mxu0 0.0
    %62 = vmatpush.msra.mxu0 0.0
    %63 = vmatpush.msra.mxu0 0.0
    %64 = vmatpush.msra.mxu0 0.0
    %65 = vmatpush.msra.mxu0 0.0
    %66 = vmatpush.msra.mxu0 0.0
    %67 = vmatpush.msra.mxu0 0.0
    %68 = vmatpush.msra.mxu0 %v55
    %69 = vmatpush.msra.mxu0 %v54
    %70 = vmatpush.msra.mxu0 %v53
    %71 = vmatpush.msra.mxu0 %v52
    %72 = vmatmul.f32.gmra.mxu0 %v23
    %v73 = vpop.f32.mrf.mxu0
    %v74 = vadd.f32 0.0, %v73
    %75 = vmatmul.f32.gmra.mxu0 %v26
    %v76 = vpop.f32.mrf.mxu0
    %v77 = vadd.f32 0.0, %v76
    %78 = vdwg.mxu0
    %v79 = vxor.u32 %v46, 2147483648
    %v80 = vxor.u32 %v49, 2147483648
    %v81 = vmul.f32 %v79, 1.442695
    %v82 = vpow.pop %v81
    %v83 = vmul.f32 %v80, 1.442695
    %v84 = vpow.pop %v83
    %v85 = vadd.f32 %v82, 1.0
    %v86 = vadd.f32 %v84, 1.0
    %v87 = vrcp.pop %v85
    %v88 = vmul.f32 %v85, %v87
    %v89 = vsub.f32 1.0, %v88
    %v90 = vmul.f32 %v87, %v89
    %v91 = vadd.f32 %v87, %v90
    %vm92 = vweird.f32 %v85
    %vm93 = vweird.f32 %v87
    %vm94 = vmor %vm92, %vm93
    %v95 = vsel %vm94, %v87, %v91
    %v96 = vand.u32 2147483647, %v85
    %vm97 = vcmp.eq.f32.partialorder %v96, 8.507059e+37
    %v98 = vand.u32 %v85, 2147483648
    %v99 = vor.u32 1.1754944e-38, %v98
    %v100 = vsel %vm97, %v99, %v95
    %v101 = vmul.f32 1.0, %v100
    %v102 = vrcp.pop %v86
    %v103 = vmul.f32 %v86, %v102
    %v104 = vsub.f32 1.0, %v103
    %v105 = vmul.f32 %v102, %v104
    %v106 = vadd.f32 %v102, %v105
    %vm107 = vweird.f32 %v86
    %vm108 = vweird.f32 %v102
    %vm109 = vmor %vm107, %vm108
    %v110 = vsel %vm109, %v102, %v106
    %v111 = vand.u32 2147483647, %v86
    %vm112 = vcmp.eq.f32.partialorder %v111, 8.507059e+37
    %v113 = vand.u32 %v86, 2147483648
    %v114 = vor.u32 1.1754944e-38, %v113
    %v115 = vsel %vm112, %v114, %v110
    %v116 = vmul.f32 1.0, %v115
    %v117 = vmul.f32 %v46, %v101
    %v118 = vmul.f32 %v49, %v116
    %v119 = vmul.f32 %v117, %v74
    %v120 = vmul.f32 %v118, %v77
    %v121 = vld [vmem:[%s2] sm:$0xff]
    %v122 = vld [vmem:[%s2 + $0x8] sm:$0xff]
    %v123 = vld [vmem:[%s2 + $0x10] sm:$0xff]
    %v124 = vld [vmem:[%s2 + $0x18] sm:$0xff]
    %v125 = vld [vmem:[%s2 + $0x20] sm:$0xff]
    %v126 = vld [vmem:[%s2 + $0x28] sm:$0xff]
    %v127 = vld [vmem:[%s2 + $0x30] sm:$0xff]
    %v128 = vld [vmem:[%s2 + $0x38] sm:$0xff]
    %v129 = vld [vmem:[%s2 + $0x40] sm:$0xff]
    %v130 = vld [vmem:[%s2 + $0x48] sm:$0xff]
    %v131 = vld [vmem:[%s2 + $0x50] sm:$0xff]
    %v132 = vld [vmem:[%s2 + $0x58] sm:$0xff]
    %v133 = vld [vmem:[%s2 + $0x60] sm:$0xff]
    %v134 = vld [vmem:[%s2 + $0x68] sm:$0xff]
    %v135 = vld [vmem:[%s2 + $0x70] sm:$0xff]
    %v136 = vld [vmem:[%s2 + $0x78] sm:$0xff]
    %137 = vmatpush.msra.mxu0 %v136
    %138 = vmatpush.msra.mxu0 %v135
    %139 = vmatpush.msra.mxu0 %v134
    %140 = vmatpush.msra.mxu0 %v133
    %141 = vmatpush.msra.mxu0 %v132
    %142 = vmatpush.msra.mxu0 %v131
    %143 = vmatpush.msra.mxu0 %v130
    %144 = vmatpush.msra.mxu0 %v129
    %145 = vmatpush.msra.mxu0 %v128
    %146 = vmatpush.msra.mxu0 %v127
    %147 = vmatpush.msra.mxu0 %v126
    %148 = vmatpush.msra.mxu0 %v125
    %149 = vmatpush.msra.mxu0 %v124
    %150 = vmatpush.msra.mxu0 %v123
    %151 = vmatpush.msra.mxu0 %v122
    %152 = vmatpush.msra.mxu0 %v121
    %153 = vmatmul.f32.gmra.mxu0 %v119
    %v154 = vpop.f32.mrf.mxu0
    %v155 = vadd.f32 0.0, %v154
    %156 = vmatmul.f32.gmra.mxu0 %v120
    %v157 = vpop.f32.mrf.mxu0
    %v158 = vadd.f32 0.0, %v157
    %159 = vdwg.mxu0
    %p160 = scmp.eq.s32.totalorder 0, 0
    // Predicated region
    $region14: #{llama_mlp.1} parent=1 // pred_check
      %p161 = pneg %p160
    $region15: #{llama_mlp.1} parent=1 // pred_check_branch
      %163 = sbr.rel (%p161) target = $region17
    $region16: #{llama_mlp.1} parent=1 // pred_region
      %164 = vst.msk [vmem:[#allocation2] sm:$0xff] %vm21, %v155
      %165 = vst.msk [vmem:[#allocation2 + $0x8] sm:$0xff] %vm21, %v158
    $region17: #{llama_mlp.1} parent=1 // pred_fallthru
      _
    %p166 = scmp.gt.s32.totalorder 0, 0
    // Predicated region
    $region18: #{llama_mlp.1} parent=1 // pred_check
      %p167 = pneg %p166
    $region19: #{llama_mlp.1} parent=1 // pred_check_branch
      %169 = sbr.rel (%p167) target = $region21
    $region20: #{llama_mlp.1} parent=1 // pred_region
      %v170 = vld [vmem:[#allocation2] sm:$0xff]
      %v171 = vld [vmem:[#allocation2 + $0x8] sm:$0xff]
      %v172 = vadd.f32 %v170, %v155
      %v173 = vadd.f32 %v171, %v158
      %174 = vst.msk [vmem:[#allocation2] sm:$0xff] %vm21, %v172
      %175 = vst.msk [vmem:[#allocation2 + $0x8] sm:$0xff] %vm21, %v173
    $region21: #{llama_mlp.1} parent=1 // pred_fallthru
      _
    // Predicated region
    $region22: #{llama_mlp.1} parent=1 // pred_check
      %p176 = pneg %p160
    $region23: #{llama_mlp.1} parent=1 // pred_check_branch
      %178 = sbr.rel (%p176) target = $region25
    $region24: #{llama_mlp.1} parent=1 // pred_region
      %v179 = vld [vmem:[#allocation2] sm:$0xff]
      %v180 = vld [vmem:[#allocation2 + $0x8] sm:$0xff]
      %181 = vst.msk [vmem:[#allocation3] sm:$0xff] %vm21, %v179
      %182 = vst.msk [vmem:[#allocation3 + $0x8] sm:$0xff] %vm21, %v180
    $region25: #{llama_mlp.1} parent=1 // pred_fallthru
      _
    // Predicated region
    $region26: #{llama_mlp.1} parent=1 // pred_check
      _
    $region27: #{llama_mlp.1} parent=1 // pred_check_branch
      %184 = sbr.rel (0) target = $region29
    $region28: #{llama_mlp.1} parent=1 // pred_region
      %186 = vsyncadd [#allocation4], 0
      %s187 = sshll.u32 [#allocation3], 4
      %s188 = int_to_ptr.vmem [resolvable:$true] %s187
      %s189 = sshll.u32 %s3, 4
      %s190 = int_to_ptr.hbm [resolvable:$true] %s189
      %195 = dma.vmem_to_hbm [thread:$0]  %s188, 256, %s190, [#allocation4], 128, 128, 8
    $region29: #{llama_mlp.1} parent=1 // pred_fallthru
      _
    // Predicated region
    $region30: #{llama_mlp.1} parent=1 // pred_check
      _
    $region31: #{llama_mlp.1} parent=1 // pred_check_branch
      %197 = sbr.rel (0) target = $region33
    $region32: #{llama_mlp.1} parent=1 // pred_region
      %199 = dma.done [#allocation4], 256
    $region33: #{llama_mlp.1} parent=1 // pred_fallthru
      _
    %200 = vsyncpa [#allocation4], 1

</llo_original>
